<compile_context>
chip_gen: v6e
topology: v6e:2x2x1
jax: 0.10.0
libtpu: 0.0.40
codegen_flags: <defaults>
</compile_context>

<pallas_src>
import math

import numpy as np
import jax
import jax.numpy as jnp
from jax.experimental import pallas as pl
from jax.experimental.pallas import tpu as pltpu

LANE = 128
SUBLANE = 8


def _round_up(n, m):
    return ((n + m - 1) // m) * m


# -----------------------------------------------------------------------------
# Fused kernel: block-diagonal MLP chain + combine stage, one dense output slab
# -----------------------------------------------------------------------------
def _make_fused_hnn_kernel(n_layers, n_non, n_trend):
    """n_layers block-diagonal linear layers (ReLU between), then combine.

    Ref order: x, W_0..W_{L-1} (bf16), bias_all (f32, stacked), out.
    NOTE: assumes the trend groups are exactly the LAST n_trend groups in
    x_pos (same assumption as the PyTorch module's divisor logic).
    """

    def kernel(*refs):
        x_ref = refs[0]
        w_refs = refs[1:1 + n_layers]
        bias_ref = refs[1 + n_layers]
        out_ref = refs[2 + n_layers]

        # MXU chain: bf16 operands, f32 accumulation; elementwise stays f32.
        h = x_ref[...].astype(jnp.bfloat16)            # (TB, F)
        final = None
        for l in range(n_layers):
            w = w_refs[l][...]                          # bf16 (in_pad, out_pad)
            out_w = w.shape[1]
            acc = jnp.dot(h, w, preferred_element_type=jnp.float32)
            acc = acc + bias_ref[l:l + 1, :out_w]       # f32 bias row broadcast
            if l < n_layers - 1:
                # dropout == identity (eval mode)
                h = jnp.maximum(acc, 0.0).astype(jnp.bfloat16)
            else:
                final = acc                              # (TB, out_pad_last) f32

        # combine stage (all f32): per-group outputs live in lanes 0..G-1
        comp_raw = final[:, :n_non]                              # gaps (raw)
        trend_abs = jnp.abs(final[:, n_non:n_non + n_trend])     # trends
        comp_mul = comp_raw[:, :n_trend] * trend_abs
        if n_non > n_trend:
            components = jnp.concatenate(
                [comp_mul, comp_raw[:, n_trend:]], axis=1)
        else:
            components = comp_mul
        yhat = jnp.sum(components, axis=1, keepdims=True)        # XLU reduce

        # ONE lane-dense, full-width store:
        #   [ yhat | components (n_non) | trends (n_trend) | gaps (n_non) | 0s ]
        used = 1 + 2 * n_non + n_trend
        pad_w = out_ref.shape[1] - used
        pieces = [yhat, components, trend_abs, comp_raw]
        if pad_w > 0:
            pieces.append(jnp.zeros((out_ref.shape[0], pad_w), jnp.float32))
        out_ref[...] = jnp.concatenate(pieces, axis=1)

    return kernel


# -----------------------------------------------------------------------------
# Parameter construction + packing
# -----------------------------------------------------------------------------
def init_hnn_params(key, nn_hyps):
    """Deterministic PyTorch-Linear-style init; weights stored as (in, out)."""
    n_features = nn_hyps['n_features']
    nodes = nn_hyps['nodes']
    n_group = len(nn_hyps['x_pos'])
    params = []
    for i in range(n_group):
        # layer dims: input, first, hidden..., output
        dims = [n_features[i], nodes[i][0]] + list(nodes[i]) + [1]
        group_params = []
        for k in range(len(dims) - 1):
            key, kw, kb = jax.random.split(key, 3)
            bound = 1.0 / math.sqrt(dims[k])
            w = jax.random.uniform(kw, (dims[k], dims[k + 1]), jnp.float32,
                                   -bound, bound)
            b = jax.random.uniform(kb, (1, dims[k + 1]), jnp.float32,
                                   -bound, bound)
            group_params.append((w, b))
        params.append(group_params)
    return params


def pack_hnn_params(params, nn_hyps, n_total_features):
    """Block-diagonalize per-group weights per layer (128-lane padded, bf16).

    Layer 0 additionally folds BOTH the per-group column gather of x (rows are
    placed at the original feature indices) and the 1/sqrt(group_size)
    divisor into the weight rows, so the kernel consumes x directly.
    Biases are stacked into one (n_layers, max_out_pad) f32 array.
    """
    x_pos = nn_hyps['x_pos']
    n_group = len(x_pos)
    n_add = len(nn_hyps['add_trends_to'])
    n_layers = len(params[0])
    divs = [1.0 if i > n_group - n_add - 1 else math.sqrt(len(x_pos[i]))
            for i in range(n_group)]

    weights = []
    bias_rows = []
    for l in range(n_layers):
        in_dims = [params[i][l][0].shape[0] for i in range(n_group)]
        out_dims = [params[i][l][0].shape[1] for i in range(n_group)]
        out_pad = _round_up(sum(out_dims), LANE)
        bias = np.zeros((out_pad,), np.float32)
        if l == 0:
            # rows indexed by ORIGINAL feature position; gather + divisor folded
            W = np.zeros((n_total_features, out_pad), np.float32)
            co = 0
            for i in range(n_group):
                w = np.asarray(params[i][l][0], np.float32) / divs[i]
                b = np.asarray(params[i][l][1], np.float32)
                for j, feat in enumerate(x_pos[i]):
                    W[feat, co:co + out_dims[i]] += w[j]
                bias[co:co + out_dims[i]] = b[0]
                co += out_dims[i]
        else:
            in_pad = _round_up(sum(in_dims), LANE)
            W = np.zeros((in_pad, out_pad), np.float32)
            ro = co = 0
            for i in range(n_group):
                w = np.asarray(params[i][l][0], np.float32)
                b = np.asarray(params[i][l][1], np.float32)
                W[ro:ro + in_dims[i], co:co + out_dims[i]] = w
                bias[co:co + out_dims[i]] = b[0]
                ro += in_dims[i]
                co += out_dims[i]
        weights.append(jnp.asarray(W).astype(jnp.bfloat16))   # bf16 MXU operands
        bias_rows.append(bias)

    max_w = max(b.shape[0] for b in bias_rows)
    bias_all = np.zeros((n_layers, max_w), np.float32)
    for l, b in enumerate(bias_rows):
        bias_all[l, :b.shape[0]] = b
    return weights, jnp.asarray(bias_all)


# -----------------------------------------------------------------------------
# Forward (single fused pallas_call)
# -----------------------------------------------------------------------------
def hnn_forward(x, packed_weights, bias_all, nn_hyps):
    x_pos = nn_hyps['x_pos']
    n_group = len(x_pos)
    n_add = len(nn_hyps['add_trends_to'])
    n_non = n_group - n_add
    n_trend = n_add
    n_layers = len(packed_weights)

    B, F = x.shape
    assert F == packed_weights[0].shape[0], "x width must match packed W0 rows"

    # Batch tile: large tiles amortize the ~0.35us/step pipeline overhead;
    # cap so the grid keeps >= 2 steps (v7x: 2 TensorCores share the
    # "parallel" axis).  Small batches use a sublane-aligned tile.
    if B <= LANE:
        TB = _round_up(max(B, 1), SUBLANE)
    else:
        TB = min(1024, _round_up(pl.cdiv(B, 2), LANE))
    B_pad = _round_up(B, TB)

    x_in = x.astype(jnp.float32)
    if B_pad != B:
        # only a narrow (B_pad, F) batch pad; no lane inflation, no gather
        x_in = jnp.zeros((B_pad, F), jnp.float32).at[:B].set(x_in)

    used = 1 + 2 * n_non + n_trend
    OUT_PAD = _round_up(used, LANE)

    kernel = _make_fused_hnn_kernel(n_layers, n_non, n_trend)

    in_arrays = [x_in]
    in_specs = [pl.BlockSpec((TB, F), lambda i: (i, 0))]
    for w in packed_weights:
        in_arrays.append(w)
        in_specs.append(pl.BlockSpec(w.shape, lambda i: (0, 0)))   # VMEM-resident
    in_arrays.append(bias_all)
    in_specs.append(pl.BlockSpec(bias_all.shape, lambda i: (0, 0)))

    slab = pl.pallas_call(
        kernel,
        grid=(B_pad // TB,),
        in_specs=in_specs,
        out_specs=pl.BlockSpec((TB, OUT_PAD), lambda i: (i, 0)),
        out_shape=jax.ShapeDtypeStruct((B_pad, OUT_PAD), jnp.float32),
        compiler_params=pltpu.CompilerParams(
            dimension_semantics=("parallel",)),
    )(*in_arrays)

    yhat = slab[:B, 0]
    components = slab[:B, 1:1 + n_non]
    trends = slab[:B, 1 + n_non:1 + n_non + n_trend]
    gaps = slab[:B, 1 + n_non + n_trend:1 + 2 * n_non + n_trend]
    return [yhat, components, trends, gaps]


# -----------------------------------------------------------------------------
# Pure-JAX reference mirroring the PyTorch forward (eval mode, f32)
# -----------------------------------------------------------------------------
def hnn_forward_ref(x, params, nn_hyps):
    x_pos = nn_hyps['x_pos']
    n_group = len(x_pos)
    n_add = len(nn_hyps['add_trends_to'])
    xx = []
    for i in range(n_group):
        idx = jnp.asarray(x_pos[i], dtype=jnp.int32)
        div = 1.0 if i > n_group - n_add - 1 else math.sqrt(len(x_pos[i]))
        h = x[:, idx].astype(jnp.float32) / div
        layers = params[i]
        for k, (w, b) in enumerate(layers):
            h = h @ w + b
            if k < len(layers) - 1:
                h = jnp.maximum(h, 0.0)
        xx.append(h)
    trends = [jnp.abs(xx[i]) for i in range(n_group - n_add, n_group)]
    outs = [xx[i] for i in range(n_group - n_add)]
    gaps_alt = list(outs)
    for i in range(n_add):
        outs[i] = outs[i] * trends[i]
    components = jnp.concatenate(outs, axis=1)
    gaps = jnp.concatenate(gaps_alt, axis=1)
    trends_c = jnp.concatenate(trends, axis=1)
    yhat = jnp.sum(components, axis=1)
    return [yhat, components, trends_c, gaps]


# -----------------------------------------------------------------------------
if __name__ == "__main__":
    nn_hyps = {
        'n_features': [4, 4, 2],
        'nodes': [[32, 32], [32, 32], [32, 32]],
        'x_pos': [[0, 1, 2, 3], [4, 5, 6, 7], [8, 9]],
        'dropout_rate': 0.0,           # eval mode: dropout is identity
        'add_trends_to': [0],          # one trend group (the last group)
    }
    # TODO(synk): train-mode dropout (random masking) is not implemented;
    # the kernel matches the module's deterministic eval-mode forward.

    key = jax.random.PRNGKey(0)
    key, kx = jax.random.split(key)
    B, n_total_features = 8, 10
    x = jax.random.normal(kx, (B, n_total_features), dtype=jnp.float32)

    params = init_hnn_params(key, nn_hyps)
    packed_w, packed_b = pack_hnn_params(params, nn_hyps, n_total_features)

    fwd = jax.jit(lambda xx: tuple(hnn_forward(xx, packed_w, packed_b, nn_hyps)))
    yhat, components, trends, gaps = fwd(x)
    jax.block_until_ready(yhat)

    # correctness check against pure-JAX f32 reference (kernel uses bf16 MXU
    # operands with f32 accumulation -> looser tolerance per review)
    r_yhat, r_comp, r_trends, r_gaps = hnn_forward_ref(x, params, nn_hyps)
    assert yhat.shape == (B,)
    assert components.shape == (B, 2) and gaps.shape == (B, 2)
    assert trends.shape == (B, 1)
    for a, b in [(yhat, r_yhat), (components, r_comp),
                 (trends, r_trends), (gaps, r_gaps)]:
        assert jnp.allclose(a, b, rtol=2e-2, atol=2e-2), "mismatch vs reference"

    print("KERNEL_OK")
</pallas_src>

<mosaic_0001>
module attributes {stable_mosaic.version = 11 : i64} {
  func.func @kernel(%arg0: i32, %arg1: memref<8x10xf32, #tpu.memory_space<vmem>>, %arg2: memref<10x128xbf16, #tpu.memory_space<vmem>>, %arg3: memref<128x128xbf16, #tpu.memory_space<vmem>>, %arg4: memref<128x128xbf16, #tpu.memory_space<vmem>>, %arg5: memref<128x128xbf16, #tpu.memory_space<vmem>>, %arg6: memref<4x128xf32, #tpu.memory_space<vmem>>, %arg7: memref<8x128xf32, #tpu.memory_space<vmem>>) attributes {dimension_semantics = [#tpu.dimension_semantics<parallel>], iteration_bounds = array<i64: 1>, scalar_prefetch = 0 : i64, scratch_operands = 0 : i64, tpu.core_type = #tpu.core_type<tc>, window_params = [{transform_indices = @transform_0, window_bounds = array<i64: 8, 10>}, {pipeline_mode = #tpu.pipeline_mode<synchronous>, transform_indices = @transform_1, window_bounds = array<i64: 10, 128>}, {pipeline_mode = #tpu.pipeline_mode<synchronous>, transform_indices = @transform_2, window_bounds = array<i64: 128, 128>}, {pipeline_mode = #tpu.pipeline_mode<synchronous>, transform_indices = @transform_3, window_bounds = array<i64: 128, 128>}, {pipeline_mode = #tpu.pipeline_mode<synchronous>, transform_indices = @transform_4, window_bounds = array<i64: 128, 128>}, {pipeline_mode = #tpu.pipeline_mode<synchronous>, transform_indices = @transform_5, window_bounds = array<i64: 4, 128>}, {transform_indices = @transform_6, window_bounds = array<i64: 8, 128>}]} {
    %c0 = arith.constant 0 : index
    %c0_0 = arith.constant 0 : index
    %0 = vector.load %arg1[%c0, %c0_0] : memref<8x10xf32, #tpu.memory_space<vmem>>, vector<8x10xf32>
    %1 = arith.truncf %0 : vector<8x10xf32> to vector<8x10xbf16>
    %c0_1 = arith.constant 0 : index
    %c0_2 = arith.constant 0 : index
    %2 = vector.load %arg2[%c0_1, %c0_2] : memref<10x128xbf16, #tpu.memory_space<vmem>>, vector<10x128xbf16>
    %cst = arith.constant dense<0.000000e+00> : vector<8x128xf32>
    %3 = tpu.matmul %1, %2, %cst {dimension_numbers = #tpu.dot_dimension_numbers<[1], [0], [0], [1], [0, 0, 1, 1], [], []>} : vector<8x10xbf16>, vector<10x128xbf16>, vector<8x128xf32> -> vector<8x128xf32>
    %c0_3 = arith.constant 0 : index
    %c0_4 = arith.constant 0 : index
    %4 = vector.load %arg6[%c0_3, %c0_4] : memref<4x128xf32, #tpu.memory_space<vmem>>, vector<1x128xf32>
    %5 = vector.broadcast %4 : vector<1x128xf32> to vector<8x128xf32>
    %6 = arith.addf %3, %5 : vector<8x128xf32>
    %cst_5 = arith.constant 0.000000e+00 : f32
    %7 = vector.broadcast %cst_5 : f32 to vector<8x128xf32>
    %8 = arith.maximumf %6, %7 : vector<8x128xf32>
    %9 = arith.truncf %8 : vector<8x128xf32> to vector<8x128xbf16>
    %c0_6 = arith.constant 0 : index
    %c0_7 = arith.constant 0 : index
    %10 = vector.load %arg3[%c0_6, %c0_7] : memref<128x128xbf16, #tpu.memory_space<vmem>>, vector<128x128xbf16>
    %cst_8 = arith.constant dense<0.000000e+00> : vector<8x128xf32>
    %11 = tpu.matmul %9, %10, %cst_8 {dimension_numbers = #tpu.dot_dimension_numbers<[1], [0], [0], [1], [0, 0, 1, 1], [], []>} : vector<8x128xbf16>, vector<128x128xbf16>, vector<8x128xf32> -> vector<8x128xf32>
    %c1 = arith.constant 1 : index
    %c0_9 = arith.constant 0 : index
    %12 = vector.load %arg6[%c1, %c0_9] : memref<4x128xf32, #tpu.memory_space<vmem>>, vector<1x128xf32>
    %13 = vector.broadcast %12 : vector<1x128xf32> to vector<8x128xf32>
    %14 = arith.addf %11, %13 : vector<8x128xf32>
    %cst_10 = arith.constant 0.000000e+00 : f32
    %15 = vector.broadcast %cst_10 : f32 to vector<8x128xf32>
    %16 = arith.maximumf %14, %15 : vector<8x128xf32>
    %17 = arith.truncf %16 : vector<8x128xf32> to vector<8x128xbf16>
    %c0_11 = arith.constant 0 : index
    %c0_12 = arith.constant 0 : index
    %18 = vector.load %arg4[%c0_11, %c0_12] : memref<128x128xbf16, #tpu.memory_space<vmem>>, vector<128x128xbf16>
    %cst_13 = arith.constant dense<0.000000e+00> : vector<8x128xf32>
    %19 = tpu.matmul %17, %18, %cst_13 {dimension_numbers = #tpu.dot_dimension_numbers<[1], [0], [0], [1], [0, 0, 1, 1], [], []>} : vector<8x128xbf16>, vector<128x128xbf16>, vector<8x128xf32> -> vector<8x128xf32>
    %c2 = arith.constant 2 : index
    %c0_14 = arith.constant 0 : index
    %20 = vector.load %arg6[%c2, %c0_14] : memref<4x128xf32, #tpu.memory_space<vmem>>, vector<1x128xf32>
    %21 = vector.broadcast %20 : vector<1x128xf32> to vector<8x128xf32>
    %22 = arith.addf %19, %21 : vector<8x128xf32>
    %cst_15 = arith.constant 0.000000e+00 : f32
    %23 = vector.broadcast %cst_15 : f32 to vector<8x128xf32>
    %24 = arith.maximumf %22, %23 : vector<8x128xf32>
    %25 = arith.truncf %24 : vector<8x128xf32> to vector<8x128xbf16>
    %c0_16 = arith.constant 0 : index
    %c0_17 = arith.constant 0 : index
    %26 = vector.load %arg5[%c0_16, %c0_17] : memref<128x128xbf16, #tpu.memory_space<vmem>>, vector<128x128xbf16>
    %cst_18 = arith.constant dense<0.000000e+00> : vector<8x128xf32>
    %27 = tpu.matmul %25, %26, %cst_18 {dimension_numbers = #tpu.dot_dimension_numbers<[1], [0], [0], [1], [0, 0, 1, 1], [], []>} : vector<8x128xbf16>, vector<128x128xbf16>, vector<8x128xf32> -> vector<8x128xf32>
    %c3 = arith.constant 3 : index
    %c0_19 = arith.constant 0 : index
    %28 = vector.load %arg6[%c3, %c0_19] : memref<4x128xf32, #tpu.memory_space<vmem>>, vector<1x128xf32>
    %29 = vector.broadcast %28 : vector<1x128xf32> to vector<8x128xf32>
    %30 = arith.addf %27, %29 : vector<8x128xf32>
    %31 = vector.extract_strided_slice %30 {offsets = [0, 0], sizes = [8, 2], strides = [1, 1]} : vector<8x128xf32> to vector<8x2xf32>
    %32 = vector.extract_strided_slice %30 {offsets = [0, 2], sizes = [8, 1], strides = [1, 1]} : vector<8x128xf32> to vector<8x1xf32>
    %33 = math.absf %32 : vector<8x1xf32>
    %34 = vector.extract_strided_slice %31 {offsets = [0, 0], sizes = [8, 1], strides = [1, 1]} : vector<8x2xf32> to vector<8x1xf32>
    %35 = arith.mulf %34, %33 : vector<8x1xf32>
    %36 = vector.extract_strided_slice %31 {offsets = [0, 1], sizes = [8, 1], strides = [1, 1]} : vector<8x2xf32> to vector<8x1xf32>
    %37 = tpu.concatenate %35, %36 in 1 : vector<8x1xf32>, vector<8x1xf32> -> vector<8x2xf32>
    %cst_20 = arith.constant dense<0.000000e+00> : vector<8xf32>
    %38 = vector.multi_reduction <add>, %37, %cst_20 [1] : vector<8x2xf32> to vector<8xf32>
    %39 = vector.shape_cast %38 : vector<8xf32> to vector<8x1xf32>
    %cst_21 = arith.constant 0.000000e+00 : f32
    %40 = vector.broadcast %cst_21 : f32 to vector<8x122xf32>
    %41 = tpu.concatenate %39, %37, %33, %31, %40 in 1 : vector<8x1xf32>, vector<8x2xf32>, vector<8x1xf32>, vector<8x2xf32>, vector<8x122xf32> -> vector<8x128xf32>
    %c0_22 = arith.constant 0 : index
    %c0_23 = arith.constant 0 : index
    %42 = vector.load %arg7[%c0_22, %c0_23] : memref<8x128xf32, #tpu.memory_space<vmem>>, vector<8x128xf32>
    tpu.vector_store %arg7[%c0_22, %c0_23], %41 {strides = array<i32>} : memref<8x128xf32, #tpu.memory_space<vmem>>, vector<8x128xf32>,
    return
  }
  func.func @transform_0(%arg0: i32) -> (i32, i32) {
    %c0_i32 = arith.constant 0 : i32
    %c0_i32_0 = arith.constant 0 : i32
    return %arg0, %c0_i32 : i32, i32
  }
  func.func @transform_1(%arg0: i32) -> (i32, i32) {
    %c0_i32 = arith.constant 0 : i32
    %c0_i32_0 = arith.constant 0 : i32
    %c0_i32_1 = arith.constant 0 : i32
    return %c0_i32, %c0_i32_0 : i32, i32
  }
  func.func @transform_2(%arg0: i32) -> (i32, i32) {
    %c0_i32 = arith.constant 0 : i32
    %c0_i32_0 = arith.constant 0 : i32
    %c0_i32_1 = arith.constant 0 : i32
    return %c0_i32, %c0_i32_0 : i32, i32
  }
  func.func @transform_3(%arg0: i32) -> (i32, i32) {
    %c0_i32 = arith.constant 0 : i32
    %c0_i32_0 = arith.constant 0 : i32
    %c0_i32_1 = arith.constant 0 : i32
    return %c0_i32, %c0_i32_0 : i32, i32
  }
  func.func @transform_4(%arg0: i32) -> (i32, i32) {
    %c0_i32 = arith.constant 0 : i32
    %c0_i32_0 = arith.constant 0 : i32
    %c0_i32_1 = arith.constant 0 : i32
    return %c0_i32, %c0_i32_0 : i32, i32
  }
  func.func @transform_5(%arg0: i32) -> (i32, i32) {
    %c0_i32 = arith.constant 0 : i32
    %c0_i32_0 = arith.constant 0 : i32
    %c0_i32_1 = arith.constant 0 : i32
    return %c0_i32, %c0_i32_0 : i32, i32
  }
  func.func @transform_6(%arg0: i32) -> (i32, i32) {
    %c0_i32 = arith.constant 0 : i32
    %c0_i32_0 = arith.constant 0 : i32
    return %arg0, %c0_i32 : i32, i32
  }
}

</mosaic_0001>

<llo_original>
// kernel: _lambda_.1
$region0: #{_lambda_.1}
  #allocation0 [shape = 'u32[]', space=smem, size = 0x4, offset = 0x4, fixed_abs, tag = 'smem constant byte address 0x4 - core index']
  #allocation1 [shape = 'u32[144,128]{1,0:T(1,128)}', space=vmem, size = 0x12000, scoped, tag = 'internal scratch']
  %s0 = inlined_call_operand.hbm [shape: f32[8,10], index: 0, kind: input, shape index: {}]
  %s1 = inlined_call_operand.hbm [shape: bf16[10,128], index: 1, kind: input, shape index: {}]
  %s2 = inlined_call_operand.hbm [shape: bf16[128,128], index: 2, kind: input, shape index: {}]
  %s3 = inlined_call_operand.hbm [shape: bf16[128,128], index: 3, kind: input, shape index: {}]
  %s4 = inlined_call_operand.hbm [shape: bf16[128,128], index: 4, kind: input, shape index: {}]
  %s5 = inlined_call_operand.vmem [shape: f32[4,128], index: 5, kind: input, shape index: {}]
  %s6 = inlined_call_operand.vmem [shape: f32[8,128], index: 6, kind: output, shape index: {}]
  %s7 = sld [smem:[#allocation0]]
  $region54: #{_lambda_.1} parent=0
    _
  %s9 = ssub.s32 1, %s7
  %s10 = scalar_select 0, %s9, %s7
  $region1: #{_lambda_.1} parent=0
    #allocation2 [shape = 'u8[4096]{0}', space=vmem, size = 0x1000, scoped, tag = 'input window, operand 0, single buffered']
    #allocation3 [shape = 's32[1]{0}', space=sflag, size = 0x4, scoped, tag = 'scoped memory for _lambda_.1']
    #allocation4 [shape = 'u8[4096]{0}', space=vmem, size = 0x1000, scoped, tag = 'input window, operand 1, single buffered']
    #allocation5 [shape = 's32[1]{0}', space=sflag, size = 0x4, scoped, tag = 'scoped memory for _lambda_.1']
    #allocation6 [shape = 'u8[32768]{0}', space=vmem, size = 0x8000, scoped, tag = 'input window, operand 2, single buffered']
    #allocation7 [shape = 'u8[32768]{0}', space=vmem, size = 0x8000, scoped, tag = 'input window, operand 3, single buffered']
    #allocation8 [shape = 's32[1]{0}', space=sflag, size = 0x4, scoped, tag = 'scoped memory for _lambda_.1']
    #allocation9 [shape = 'u8[32768]{0}', space=vmem, size = 0x8000, scoped, tag = 'input window, operand 4, single buffered']
    %11 = vsyncpa [#allocation3], 0
    %12 = vsyncpa [#allocation5], 0
    %13 = vsyncpa [#allocation8], 0
    // Predicated region
    $region2: #{_lambda_.1} parent=1 // pred_check
      _
    $region3: #{_lambda_.1} parent=1 // pred_check_branch
      %15 = sbr.rel (0) target = $region5
    $region4: #{_lambda_.1} parent=1 // pred_region
      %s17 = ssub.s32 128, 128
      %18 = vsyncadd [#allocation3], %s17
      %s20 = sshll.u32 [#allocation2], 4
      %s21 = int_to_ptr.vmem [resolvable:$true] %s20
      %23 = dma.hbm_to_vmem [thread:$0]  %s0, 128, %s21, [#allocation3]
    $region5: #{_lambda_.1} parent=1 // pred_fallthru
      _
    // Predicated region
    $region6: #{_lambda_.1} parent=1 // pred_check
      _
    $region7: #{_lambda_.1} parent=1 // pred_check_branch
      %25 = sbr.rel (0) target = $region9
    $region8: #{_lambda_.1} parent=1 // pred_region
      %s27 = ssub.s32 128, 128
      %28 = vsyncadd [#allocation5], %s27
      %s29 = sshll.u32 [#allocation4], 4
      %s30 = int_to_ptr.vmem [resolvable:$true] %s29
      %35 = dma.hbm_to_vmem [thread:$0]  %s1, 128, %s30, [#allocation5], 64, 64, 4
    $region9: #{_lambda_.1} parent=1 // pred_fallthru
      _
    // Predicated region
    $region10: #{_lambda_.1} parent=1 // pred_check
      _
    $region11: #{_lambda_.1} parent=1 // pred_check_branch
      %37 = sbr.rel (0) target = $region13
    $region12: #{_lambda_.1} parent=1 // pred_region
      %s39 = ssub.s32 1024, 1024
      %40 = vsyncadd [#allocation5], %s39
      %s41 = sshll.u32 [#allocation6], 4
      %s42 = int_to_ptr.vmem [resolvable:$true] %s41
      %47 = dma.hbm_to_vmem [thread:$0]  %s2, 1024, %s42, [#allocation5], 64, 64, 4
    $region13: #{_lambda_.1} parent=1 // pred_fallthru
      _
    // Predicated region
    $region14: #{_lambda_.1} parent=1 // pred_check
      _
    $region15: #{_lambda_.1} parent=1 // pred_check_branch
      %49 = sbr.rel (0) target = $region17
    $region16: #{_lambda_.1} parent=1 // pred_region
      %s51 = ssub.s32 1024, 1024
      %52 = vsyncadd [#allocation8], %s51
      %s53 = sshll.u32 [#allocation7], 4
      %s54 = int_to_ptr.vmem [resolvable:$true] %s53
      %59 = dma.hbm_to_vmem [thread:$0]  %s3, 1024, %s54, [#allocation8], 64, 64, 4
    $region17: #{_lambda_.1} parent=1 // pred_fallthru
      _
    // Predicated region
    $region18: #{_lambda_.1} parent=1 // pred_check
      _
    $region19: #{_lambda_.1} parent=1 // pred_check_branch
      %61 = sbr.rel (0) target = $region21
    $region20: #{_lambda_.1} parent=1 // pred_region
      %s63 = ssub.s32 1024, 1024
      %64 = vsyncadd [#allocation8], %s63
      %s65 = sshll.u32 [#allocation9], 4
      %s66 = int_to_ptr.vmem [resolvable:$true] %s65
      %71 = dma.hbm_to_vmem [thread:$0]  %s4, 1024, %s66, [#allocation8], 64, 64, 4
    $region21: #{_lambda_.1} parent=1 // pred_fallthru
      _
    // Predicated region
    $region22: #{_lambda_.1} parent=1 // pred_check
      _
    $region23: #{_lambda_.1} parent=1 // pred_check_branch
      %73 = sbr.rel (0) target = $region25
    $region24: #{_lambda_.1} parent=1 // pred_region
      _
    $region25: #{_lambda_.1} parent=1 // pred_fallthru
      _
    // Predicated region
    $region26: #{_lambda_.1} parent=1 // pred_check
      _
    $region27: #{_lambda_.1} parent=1 // pred_check_branch
      %75 = sbr.rel (0) target = $region29
    $region28: #{_lambda_.1} parent=1 // pred_region
      %76 = dma.done [#allocation3], 128
    $region29: #{_lambda_.1} parent=1 // pred_fallthru
      _
    // Predicated region
    $region30: #{_lambda_.1} parent=1 // pred_check
      _
    $region31: #{_lambda_.1} parent=1 // pred_check_branch
      %78 = sbr.rel (0) target = $region33
    $region32: #{_lambda_.1} parent=1 // pred_region
      %79 = dma.done [#allocation5], 128
    $region33: #{_lambda_.1} parent=1 // pred_fallthru
      _
    // Predicated region
    $region34: #{_lambda_.1} parent=1 // pred_check
      _
    $region35: #{_lambda_.1} parent=1 // pred_check_branch
      %81 = sbr.rel (0) target = $region37
    $region36: #{_lambda_.1} parent=1 // pred_region
      %82 = dma.done [#allocation5], 1024
    $region37: #{_lambda_.1} parent=1 // pred_fallthru
      _
    // Predicated region
    $region38: #{_lambda_.1} parent=1 // pred_check
      _
    $region39: #{_lambda_.1} parent=1 // pred_check_branch
      %84 = sbr.rel (0) target = $region41
    $region40: #{_lambda_.1} parent=1 // pred_region
      %85 = dma.done [#allocation8], 1024
    $region41: #{_lambda_.1} parent=1 // pred_fallthru
      _
    // Predicated region
    $region42: #{_lambda_.1} parent=1 // pred_check
      _
    $region43: #{_lambda_.1} parent=1 // pred_check_branch
      %87 = sbr.rel (0) target = $region45
    $region44: #{_lambda_.1} parent=1 // pred_region
      %88 = dma.done [#allocation8], 1024
    $region45: #{_lambda_.1} parent=1 // pred_fallthru
      _
    %v90 = vld [vmem:[#allocation2] sm:$0xff]
    %v91 = vpack.c.bf16 %v90, %v90
    %v92 = vld [vmem:[#allocation4] sm:$0xf]
    %v93 = vld [vmem:[#allocation4 + $0x4] sm:$0x1]
    %v94 = vld [vmem:[%s5] sm:$0x1]
    %v95 = vlaneseq
    %v96 = vshrl.u32 %v95, 7
    %v97 = vsub.s32 0, %v96
    %v98 = vrot.slane %v94, %v97
    %v101 = vunpack.c.l.b16 %v92
    %v102 = vunpack.c.l.b16 %v93
    %v103 = vpack.c.b16 %v102, %v101
    %vm104 = vcmask 80896
    %v106 = vsel %vm104, %v91, 0
    %vm108 = vcmask 1044480
    %v110 = vsel %vm108, %v103, 0
    %112 = vmatprep.subr.bf16.mxu0 0
    %113 = vmatpush1.bf16.msra.mxu0 0
    %114 = vmatprep.subr.bf16.mxu0 0
    %115 = vmatpush1.bf16.msra.mxu0 0
    %116 = vmatprep.subr.bf16.mxu0 0
    %117 = vmatpush1.bf16.msra.mxu0 0
    %118 = vmatprep.subr.bf16.mxu0 0
    %119 = vmatpush1.bf16.msra.mxu0 0
    %120 = vmatprep.subr.bf16.mxu0 0
    %121 = vmatpush1.bf16.msra.mxu0 0
    %122 = vmatprep.subr.bf16.mxu0 0
    %123 = vmatpush1.bf16.msra.mxu0 0
    %124 = vmatprep.subr.bf16.mxu0 0
    %125 = vmatpush1.bf16.msra.mxu0 0
    %126 = vmatprep.subr.bf16.mxu0 0
    %127 = vmatpush1.bf16.msra.mxu0 %v110
    %128 = vmatprep.subr.bf16.mxu0 0
    %129 = vmatpush2.bf16.msra.mxu0 0
    %130 = vmatprep.subr.bf16.mxu0 0
    %131 = vmatpush2.bf16.msra.mxu0 0
    %132 = vmatprep.subr.bf16.mxu0 0
    %133 = vmatpush2.bf16.msra.mxu0 0
    %134 = vmatprep.subr.bf16.mxu0 0
    %135 = vmatpush2.bf16.msra.mxu0 0
    %136 = vmatprep.subr.bf16.mxu0 0
    %137 = vmatpush2.bf16.msra.mxu0 0
    %138 = vmatprep.subr.bf16.mxu0 0
    %139 = vmatpush2.bf16.msra.mxu0 0
    %140 = vmatprep.subr.bf16.mxu0 0
    %141 = vmatpush2.bf16.msra.mxu0 0
    %142 = vmatprep.subr.bf16.mxu0 0
    %143 = vmatpush2.bf16.msra.mxu0 0
    %144 = vmatprep.mubr.bf16.mxu0 0
    %145 = vmatmul.mubr.bf16.gmra.mxu0 %v106
    %v146 = vpop.f32.mrf.mxu0
    %v147 = vadd.f32 %v98, %v146
    %v148 = vpop.f32.mrf.mxu0
    %v149 = vpop.f32.mrf.mxu0
    %v150 = vpop.f32.mrf.mxu0
    %151 = vdwg.mxu0
    %v152 = vmax.f32 %v147, 0.0
    %v153 = vpack.c.bf16 %v152, %v152
    %v154 = vld [vmem:[#allocation6] sm:$0xf]
    %v155 = vld [vmem:[#allocation6 + $0x4] sm:$0xf]
    %v156 = vld [vmem:[#allocation6 + $0x8] sm:$0xf]
    %v157 = vld [vmem:[#allocation6 + $0xc] sm:$0xf]
    %v158 = vld [vmem:[#allocation6 + $0x10] sm:$0xf]
    %v159 = vld [vmem:[#allocation6 + $0x14] sm:$0xf]
    %v160 = vld [vmem:[#allocation6 + $0x18] sm:$0xf]
    %v161 = vld [vmem:[#allocation6 + $0x1c] sm:$0xf]
    %v162 = vld [vmem:[#allocation6 + $0x20] sm:$0xf]
    %v163 = vld [vmem:[#allocation6 + $0x24] sm:$0xf]
    %v164 = vld [vmem:[#allocation6 + $0x28] sm:$0xf]
    %v165 = vld [vmem:[#allocation6 + $0x2c] sm:$0xf]
    %v166 = vld [vmem:[#allocation6 + $0x30] sm:$0xf]
    %v167 = vld [vmem:[#allocation6 + $0x34] sm:$0xf]
    %v168 = vld [vmem:[#allocation6 + $0x38] sm:$0xf]
    %v169 = vld [vmem:[#allocation6 + $0x3c] sm:$0xf]
    %v170 = vld [vmem:[%s5 + $0x1] sm:$0x1]
    %v171 = vlaneseq
    %v172 = vshrl.u32 %v171, 7
    %v173 = vsub.s32 0, %v172
    %v174 = vrot.slane %v170, %v173
    %v191 = vunpack.c.l.b16 %v154
    %v192 = vunpack.c.l.b16 %v155
    %v193 = vunpack.c.l.b16 %v156
    %v194 = vunpack.c.l.b16 %v157
    %v195 = vunpack.c.l.b16 %v158
    %v196 = vunpack.c.l.b16 %v159
    %v197 = vunpack.c.l.b16 %v160
    %v198 = vunpack.c.l.b16 %v161
    %v199 = vunpack.c.l.b16 %v162
    %v200 = vunpack.c.l.b16 %v163
    %v201 = vunpack.c.l.b16 %v164
    %v202 = vunpack.c.l.b16 %v165
    %v203 = vunpack.c.l.b16 %v166
    %v204 = vunpack.c.l.b16 %v167
    %v205 = vunpack.c.l.b16 %v168
    %v206 = vunpack.c.l.b16 %v169
    %v207 = vpack.c.b16 %v192, %v191
    %v208 = vpack.c.b16 %v194, %v193
    %v209 = vpack.c.b16 %v196, %v195
    %v210 = vpack.c.b16 %v198, %v197
    %v211 = vpack.c.b16 %v200, %v199
    %v212 = vpack.c.b16 %v202, %v201
    %v213 = vpack.c.b16 %v204, %v203
    %v214 = vpack.c.b16 %v206, %v205
    %223 = vmatprep.subr.bf16.mxu0 0
    %224 = vmatpush1.bf16.msra.mxu0 %v214
    %225 = vmatprep.subr.bf16.mxu0 0
    %226 = vmatpush1.bf16.msra.mxu0 %v213
    %227 = vmatprep.subr.bf16.mxu0 0
    %228 = vmatpush1.bf16.msra.mxu0 %v212
    %229 = vmatprep.subr.bf16.mxu0 0
    %230 = vmatpush1.bf16.msra.mxu0 %v211
    %231 = vmatprep.subr.bf16.mxu0 0
    %232 = vmatpush1.bf16.msra.mxu0 %v210
    %233 = vmatprep.subr.bf16.mxu0 0
    %234 = vmatpush1.bf16.msra.mxu0 %v209
    %235 = vmatprep.subr.bf16.mxu0 0
    %236 = vmatpush1.bf16.msra.mxu0 %v208
    %237 = vmatprep.subr.bf16.mxu0 0
    %238 = vmatpush1.bf16.msra.mxu0 %v207
    %239 = vmatprep.subr.bf16.mxu0 0
    %240 = vmatpush2.bf16.msra.mxu0 0
    %241 = vmatprep.subr.bf16.mxu0 0
    %242 = vmatpush2.bf16.msra.mxu0 0
    %243 = vmatprep.subr.bf16.mxu0 0
    %244 = vmatpush2.bf16.msra.mxu0 0
    %245 = vmatprep.subr.bf16.mxu0 0
    %246 = vmatpush2.bf16.msra.mxu0 0
    %247 = vmatprep.subr.bf16.mxu0 0
    %248 = vmatpush2.bf16.msra.mxu0 0
    %249 = vmatprep.subr.bf16.mxu0 0
    %250 = vmatpush2.bf16.msra.mxu0 0
    %251 = vmatprep.subr.bf16.mxu0 0
    %252 = vmatpush2.bf16.msra.mxu0 0
    %253 = vmatprep.subr.bf16.mxu0 0
    %254 = vmatpush2.bf16.msra.mxu0 0
    %255 = vmatprep.mubr.bf16.mxu0 0
    %256 = vmatmul.mubr.bf16.gmra.mxu0 %v153
    %v257 = vpop.f32.mrf.mxu0
    %v258 = vadd.f32 %v174, %v257
    %v259 = vpop.f32.mrf.mxu0
    %v260 = vpop.f32.mrf.mxu0
    %v261 = vpop.f32.mrf.mxu0
    %262 = vdwg.mxu0
    %v263 = vmax.f32 %v258, 0.0
    %v264 = vpack.c.bf16 %v263, %v263
    %v265 = vld [vmem:[#allocation7] sm:$0xf]
    %v266 = vld [vmem:[#allocation7 + $0x4] sm:$0xf]
    %v267 = vld [vmem:[#allocation7 + $0x8] sm:$0xf]
    %v268 = vld [vmem:[#allocation7 + $0xc] sm:$0xf]
    %v269 = vld [vmem:[#allocation7 + $0x10] sm:$0xf]
    %v270 = vld [vmem:[#allocation7 + $0x14] sm:$0xf]
    %v271 = vld [vmem:[#allocation7 + $0x18] sm:$0xf]
    %v272 = vld [vmem:[#allocation7 + $0x1c] sm:$0xf]
    %v273 = vld [vmem:[#allocation7 + $0x20] sm:$0xf]
    %v274 = vld [vmem:[#allocation7 + $0x24] sm:$0xf]
    %v275 = vld [vmem:[#allocation7 + $0x28] sm:$0xf]
    %v276 = vld [vmem:[#allocation7 + $0x2c] sm:$0xf]
    %v277 = vld [vmem:[#allocation7 + $0x30] sm:$0xf]
    %v278 = vld [vmem:[#allocation7 + $0x34] sm:$0xf]
    %v279 = vld [vmem:[#allocation7 + $0x38] sm:$0xf]
    %v280 = vld [vmem:[#allocation7 + $0x3c] sm:$0xf]
    %v281 = vld [vmem:[%s5 + $0x2] sm:$0x1]
    %v282 = vlaneseq
    %v283 = vshrl.u32 %v282, 7
    %v284 = vsub.s32 0, %v283
    %v285 = vrot.slane %v281, %v284
    %v302 = vunpack.c.l.b16 %v265
    %v303 = vunpack.c.l.b16 %v266
    %v304 = vunpack.c.l.b16 %v267
    %v305 = vunpack.c.l.b16 %v268
    %v306 = vunpack.c.l.b16 %v269
    %v307 = vunpack.c.l.b16 %v270
    %v308 = vunpack.c.l.b16 %v271
    %v309 = vunpack.c.l.b16 %v272
    %v310 = vunpack.c.l.b16 %v273
    %v311 = vunpack.c.l.b16 %v274
    %v312 = vunpack.c.l.b16 %v275
    %v313 = vunpack.c.l.b16 %v276
    %v314 = vunpack.c.l.b16 %v277
    %v315 = vunpack.c.l.b16 %v278
    %v316 = vunpack.c.l.b16 %v279
    %v317 = vunpack.c.l.b16 %v280
    %v318 = vpack.c.b16 %v303, %v302
    %v319 = vpack.c.b16 %v305, %v304
    %v320 = vpack.c.b16 %v307, %v306
    %v321 = vpack.c.b16 %v309, %v308
    %v322 = vpack.c.b16 %v311, %v310
    %v323 = vpack.c.b16 %v313, %v312
    %v324 = vpack.c.b16 %v315, %v314
    %v325 = vpack.c.b16 %v317, %v316
    %334 = vmatprep.subr.bf16.mxu0 0
    %335 = vmatpush1.bf16.msra.mxu0 %v325
    %336 = vmatprep.subr.bf16.mxu0 0
    %337 = vmatpush1.bf16.msra.mxu0 %v324
    %338 = vmatprep.subr.bf16.mxu0 0
    %339 = vmatpush1.bf16.msra.mxu0 %v323
    %340 = vmatprep.subr.bf16.mxu0 0
    %341 = vmatpush1.bf16.msra.mxu0 %v322
    %342 = vmatprep.subr.bf16.mxu0 0
    %343 = vmatpush1.bf16.msra.mxu0 %v321
    %344 = vmatprep.subr.bf16.mxu0 0
    %345 = vmatpush1.bf16.msra.mxu0 %v320
    %346 = vmatprep.subr.bf16.mxu0 0
    %347 = vmatpush1.bf16.msra.mxu0 %v319
    %348 = vmatprep.subr.bf16.mxu0 0
    %349 = vmatpush1.bf16.msra.mxu0 %v318
    %350 = vmatprep.subr.bf16.mxu0 0
    %351 = vmatpush2.bf16.msra.mxu0 0
    %352 = vmatprep.subr.bf16.mxu0 0
    %353 = vmatpush2.bf16.msra.mxu0 0
    %354 = vmatprep.subr.bf16.mxu0 0
    %355 = vmatpush2.bf16.msra.mxu0 0
    %356 = vmatprep.subr.bf16.mxu0 0
    %357 = vmatpush2.bf16.msra.mxu0 0
    %358 = vmatprep.subr.bf16.mxu0 0
    %359 = vmatpush2.bf16.msra.mxu0 0
    %360 = vmatprep.subr.bf16.mxu0 0
    %361 = vmatpush2.bf16.msra.mxu0 0
    %362 = vmatprep.subr.bf16.mxu0 0
    %363 = vmatpush2.bf16.msra.mxu0 0
    %364 = vmatprep.subr.bf16.mxu0 0
    %365 = vmatpush2.bf16.msra.mxu0 0
    %366 = vmatprep.mubr.bf16.mxu0 0
    %367 = vmatmul.mubr.bf16.gmra.mxu0 %v264
    %v368 = vpop.f32.mrf.mxu0
    %v369 = vadd.f32 %v285, %v368
    %v370 = vpop.f32.mrf.mxu0
    %v371 = vpop.f32.mrf.mxu0
    %v372 = vpop.f32.mrf.mxu0
    %373 = vdwg.mxu0
    %v374 = vmax.f32 %v369, 0.0
    %v375 = vpack.c.bf16 %v374, %v374
    %v376 = vld [vmem:[#allocation9] sm:$0xf]
    %v377 = vld [vmem:[#allocation9 + $0x4] sm:$0xf]
    %v378 = vld [vmem:[#allocation9 + $0x8] sm:$0xf]
    %v379 = vld [vmem:[#allocation9 + $0xc] sm:$0xf]
    %v380 = vld [vmem:[#allocation9 + $0x10] sm:$0xf]
    %v381 = vld [vmem:[#allocation9 + $0x14] sm:$0xf]
    %v382 = vld [vmem:[#allocation9 + $0x18] sm:$0xf]
    %v383 = vld [vmem:[#allocation9 + $0x1c] sm:$0xf]
    %v384 = vld [vmem:[#allocation9 + $0x20] sm:$0xf]
    %v385 = vld [vmem:[#allocation9 + $0x24] sm:$0xf]
    %v386 = vld [vmem:[#allocation9 + $0x28] sm:$0xf]
    %v387 = vld [vmem:[#allocation9 + $0x2c] sm:$0xf]
    %v388 = vld [vmem:[#allocation9 + $0x30] sm:$0xf]
    %v389 = vld [vmem:[#allocation9 + $0x34] sm:$0xf]
    %v390 = vld [vmem:[#allocation9 + $0x38] sm:$0xf]
    %v391 = vld [vmem:[#allocation9 + $0x3c] sm:$0xf]
    %v392 = vld [vmem:[%s5 + $0x3] sm:$0x1]
    %v393 = vlaneseq
    %v394 = vshrl.u32 %v393, 7
    %v395 = vsub.s32 0, %v394
    %v396 = vrot.slane %v392, %v395
    %v413 = vunpack.c.l.b16 %v376
    %v414 = vunpack.c.l.b16 %v377
    %v415 = vunpack.c.l.b16 %v378
    %v416 = vunpack.c.l.b16 %v379
    %v417 = vunpack.c.l.b16 %v380
    %v418 = vunpack.c.l.b16 %v381
    %v419 = vunpack.c.l.b16 %v382
    %v420 = vunpack.c.l.b16 %v383
    %v421 = vunpack.c.l.b16 %v384
    %v422 = vunpack.c.l.b16 %v385
    %v423 = vunpack.c.l.b16 %v386
    %v424 = vunpack.c.l.b16 %v387
    %v425 = vunpack.c.l.b16 %v388
    %v426 = vunpack.c.l.b16 %v389
    %v427 = vunpack.c.l.b16 %v390
    %v428 = vunpack.c.l.b16 %v391
    %v429 = vpack.c.b16 %v414, %v413
    %v430 = vpack.c.b16 %v416, %v415
    %v431 = vpack.c.b16 %v418, %v417
    %v432 = vpack.c.b16 %v420, %v419
    %v433 = vpack.c.b16 %v422, %v421
    %v434 = vpack.c.b16 %v424, %v423
    %v435 = vpack.c.b16 %v426, %v425
    %v436 = vpack.c.b16 %v428, %v427
    %445 = vmatprep.subr.bf16.mxu0 0
    %446 = vmatpush1.bf16.msra.mxu0 %v436
    %447 = vmatprep.subr.bf16.mxu0 0
    %448 = vmatpush1.bf16.msra.mxu0 %v435
    %449 = vmatprep.subr.bf16.mxu0 0
    %450 = vmatpush1.bf16.msra.mxu0 %v434
    %451 = vmatprep.subr.bf16.mxu0 0
    %452 = vmatpush1.bf16.msra.mxu0 %v433
    %453 = vmatprep.subr.bf16.mxu0 0
    %454 = vmatpush1.bf16.msra.mxu0 %v432
    %455 = vmatprep.subr.bf16.mxu0 0
    %456 = vmatpush1.bf16.msra.mxu0 %v431
    %457 = vmatprep.subr.bf16.mxu0 0
    %458 = vmatpush1.bf16.msra.mxu0 %v430
    %459 = vmatprep.subr.bf16.mxu0 0
    %460 = vmatpush1.bf16.msra.mxu0 %v429
    %461 = vmatprep.subr.bf16.mxu0 0
    %462 = vmatpush2.bf16.msra.mxu0 0
    %463 = vmatprep.subr.bf16.mxu0 0
    %464 = vmatpush2.bf16.msra.mxu0 0
    %465 = vmatprep.subr.bf16.mxu0 0
    %466 = vmatpush2.bf16.msra.mxu0 0
    %467 = vmatprep.subr.bf16.mxu0 0
    %468 = vmatpush2.bf16.msra.mxu0 0
    %469 = vmatprep.subr.bf16.mxu0 0
    %470 = vmatpush2.bf16.msra.mxu0 0
    %471 = vmatprep.subr.bf16.mxu0 0
    %472 = vmatpush2.bf16.msra.mxu0 0
    %473 = vmatprep.subr.bf16.mxu0 0
    %474 = vmatpush2.bf16.msra.mxu0 0
    %475 = vmatprep.subr.bf16.mxu0 0
    %476 = vmatpush2.bf16.msra.mxu0 0
    %477 = vmatprep.mubr.bf16.mxu0 0
    %478 = vmatmul.mubr.bf16.gmra.mxu0 %v375
    %v479 = vpop.f32.mrf.mxu0
    %v480 = vadd.f32 %v396, %v479
    %v481 = vpop.f32.mrf.mxu0
    %v482 = vpop.f32.mrf.mxu0
    %v483 = vpop.f32.mrf.mxu0
    %484 = vdwg.mxu0
    %v485 = vand.u32 2147483647, %v480
    %487 = vrot.lane.b32.xlu0 %v485, 126
    %v488 = vpop.permute.xlu0 %487
    %v490 = vmul.f32 %v480, %v488
    %vm491 = vcmask 7168
    %v492 = vsel %vm491, %v490, %v480
    %vm493 = vcmask 15360
    %v494 = vsel %vm493, %v492, 0.0
    %495 = vadd.xlane.f32.xlu0 %v494
    %v496 = vpop.xlane.xlu0 %495
    %498 = vrot.lane.b32.xlu0 %v492, 1
    %v499 = vpop.permute.xlu0 %498
    %501 = vrot.lane.b32.xlu0 %v485, 1
    %v502 = vpop.permute.xlu0 %501
    %505 = vrot.lane.b32.xlu0 %v480, 4
    %v506 = vpop.permute.xlu0 %505
    %v508 = vsel %vm491, %v496, %v499
    %vm509 = vcmask 23552
    %v510 = vsel %vm509, %v508, %v502
    %vm511 = vcmask 31744
    %v512 = vsel %vm511, %v510, %v506
    %vm513 = vcmask 48128
    %v514 = vsel %vm513, %v512, 0.0
    %515 = vst [vmem:[%s6] sm:$0xff] %v514
    // Predicated region
    $region46: #{_lambda_.1} parent=1 // pred_check
      _
    $region47: #{_lambda_.1} parent=1 // pred_check_branch
      %517 = sbr.rel (0) target = $region49
    $region48: #{_lambda_.1} parent=1 // pred_region
      _
    $region49: #{_lambda_.1} parent=1 // pred_fallthru
      _
    // Predicated region
    $region50: #{_lambda_.1} parent=1 // pred_check
      _
    $region51: #{_lambda_.1} parent=1 // pred_check_branch
      %519 = sbr.rel (0) target = $region53
    $region52: #{_lambda_.1} parent=1 // pred_region
      _
    $region53: #{_lambda_.1} parent=1 // pred_fallthru
      _
    %520 = vsyncpa [#allocation3], 1
    %521 = vsyncpa [#allocation5], 1
    %522 = vsyncpa [#allocation8], 1

</llo_original>
